<compile_context>
chip_gen: v7x
topology: tpu7x:2x2x1
jax: 0.10.0
libtpu: 0.0.40
codegen_flags: <defaults>
</compile_context>

<pallas_src>
import functools

import jax
import jax.numpy as jnp
from jax.experimental import pallas as pl
from jax.experimental.pallas import tpu as pltpu


# ----------------------------------------------------------------------------
# Plain-JAX glue: sampling / grouping (gathers, sorts — not the hot path)
# ----------------------------------------------------------------------------
def square_distance(src, dst):
    # src [B,N,C], dst [B,M,C] -> [B,N,M]
    dist = -2.0 * jnp.einsum("bnc,bmc->bnm", src, dst)
    dist = dist + jnp.sum(src**2, -1)[:, :, None]
    dist = dist + jnp.sum(dst**2, -1)[:, None, :]
    return dist


def index_points(points, idx):
    # points [B,N,C], idx [B,...] -> [B,...,C]
    return jax.vmap(lambda p, i: p[i])(points, idx)


def farthest_point_sample(xyz, npoint):
    # TODO(synk): torch version seeds `farthest` with torch.randint; we use a
    # deterministic start index 0 so the script is reproducible.
    B, N, _ = xyz.shape
    centroids0 = jnp.zeros((B, npoint), jnp.int32)
    distance0 = jnp.full((B, N), 1e10, jnp.float32)
    farthest0 = jnp.zeros((B,), jnp.int32)

    def body(i, state):
        centroids, distance, farthest = state
        centroids = centroids.at[:, i].set(farthest)
        centroid = jnp.take_along_axis(xyz, farthest[:, None, None], axis=1)  # [B,1,3]
        dist = jnp.sum((xyz - centroid) ** 2, -1)
        distance = jnp.minimum(distance, dist)
        farthest = jnp.argmax(distance, -1).astype(jnp.int32)
        return centroids, distance, farthest

    centroids, _, _ = jax.lax.fori_loop(0, npoint, body, (centroids0, distance0, farthest0))
    return centroids


def query_ball_point(radius, nsample, xyz, new_xyz):
    B, N, _ = xyz.shape
    _, S, _ = new_xyz.shape
    group_idx = jnp.broadcast_to(jnp.arange(N, dtype=jnp.int32), (B, S, N))
    sqrdists = square_distance(new_xyz, xyz)
    group_idx = jnp.where(sqrdists > radius**2, N, group_idx)
    group_idx = jnp.sort(group_idx, axis=-1)[:, :, :nsample]
    group_first = group_idx[:, :, :1]
    group_idx = jnp.where(group_idx == N, group_first, group_idx)
    return group_idx


def sample_and_group(npoint, radius, nsample, xyz, points):
    B, N, C = xyz.shape
    fps_idx = farthest_point_sample(xyz, npoint)
    new_xyz = index_points(xyz, fps_idx)                       # [B,S,3]
    idx = query_ball_point(radius, nsample, xyz, new_xyz)      # [B,S,K]
    grouped_xyz = index_points(xyz, idx)                       # [B,S,K,3]
    grouped_xyz_norm = grouped_xyz - new_xyz[:, :, None, :]
    if points is not None:
        grouped_points = index_points(points, idx)             # [B,S,K,D]
        new_points = jnp.concatenate([grouped_xyz_norm, grouped_points], axis=-1)
    else:
        new_points = grouped_xyz_norm
    return new_xyz, new_points


def sample_and_group_all(xyz, points):
    B, N, C = xyz.shape
    new_xyz = jnp.zeros((B, 1, C), xyz.dtype)
    grouped_xyz = xyz.reshape(B, 1, N, C)
    if points is not None:
        new_points = jnp.concatenate([grouped_xyz, points.reshape(B, 1, N, -1)], axis=-1)
    else:
        new_points = grouped_xyz
    return new_xyz, new_points


# ----------------------------------------------------------------------------
# Pallas kernels
# ----------------------------------------------------------------------------
def _conv_stats_kernel(x_ref, w_ref, y_ref, stats_ref):
    """First layer: 1x1 conv (MXU matmul, bf16 operands / f32 acc) plus
    per-channel sum / sum-of-squares accumulation for training-mode BN.

    Grid is (split, row_tile). stats_ref's index_map is keyed on the split
    axis only, so each split (each TensorCore on v7x) owns its own resident
    partial-stats slab, accumulated across the sequential row_tile axis.
    """
    @pl.when(pl.program_id(1) == 0)
    def _():
        stats_ref[...] = jnp.zeros_like(stats_ref)

    y = jnp.dot(x_ref[...], w_ref[...], preferred_element_type=jnp.float32)
    y_ref[...] = y.astype(y_ref.dtype)          # bf16 writeback: halves HBM traffic
    # One-pass BN statistics (sum, sumsq), single fused accumulator update.
    partial = jnp.concatenate(
        [jnp.sum(y, axis=0, keepdims=True),
         jnp.sum(y * y, axis=0, keepdims=True)], axis=0)        # (2, c_out) f32
    stats_ref[...] += partial[None]


def _bnrelu_conv_stats_kernel(y_ref, scale_ref, shift_ref, w_ref,
                              ynext_ref, stats_ref):
    """Middle layers: previous layer's BN (folded to f32 scale/shift) + ReLU,
    fused with this layer's 1x1 conv and stats accumulation."""
    @pl.when(pl.program_id(1) == 0)
    def _():
        stats_ref[...] = jnp.zeros_like(stats_ref)

    a = jnp.maximum(y_ref[...].astype(jnp.float32) * scale_ref[...] + shift_ref[...],
                    0.0)
    y = jnp.dot(a.astype(jnp.bfloat16), w_ref[...], preferred_element_type=jnp.float32)
    ynext_ref[...] = y.astype(ynext_ref.dtype)
    partial = jnp.concatenate(
        [jnp.sum(y, axis=0, keepdims=True),
         jnp.sum(y * y, axis=0, keepdims=True)], axis=0)
    stats_ref[...] += partial[None]


def _bnrelu_max_kernel(y_ref, scale_ref, shift_ref, o_ref, *, tile_s, k):
    """Last layer's BN + ReLU fused with torch.max over the nsample axis.

    A row tile holds tile_s complete groups of k samples, so the max never
    crosses a block boundary and the reduce is a cheap sublane reduce."""
    a = jnp.maximum(y_ref[...].astype(jnp.float32) * scale_ref[...] + shift_ref[...],
                    0.0)
    o_ref[...] = jnp.max(a.reshape(tile_s, k, a.shape[-1]), axis=1)


# ----------------------------------------------------------------------------
# Wrapper: padding, tiling and the per-layer pass-A / pass-B pipeline
# ----------------------------------------------------------------------------
def _round_up(x, m):
    return (x + m - 1) // m * m


def _pad_channels(c):
    # Lane-dense padding: plain 128-multiples. (The old 256-multiple rule for
    # wide layers only wasted HBM bandwidth — these kernels are memory-bound.)
    return _round_up(max(c, 1), 128)


def _physical_vmem_bytes():
    try:
        return int(pltpu.get_tpu_info().vmem_capacity_bytes)
    except Exception:
        return 64 * 1024 * 1024   # conservative fallback (v7x per-core size)


def _choose_tile_s(bs, k, row_bytes, fixed_bytes, budget_bytes):
    """Largest #groups per row tile such that
       * tile_s divides bs,
       * tile_s*k is a multiple of 16 (bf16 sublane packing) and tile_s a
         multiple of 8 (f32 max-output block), or tile_s == bs (full extent),
       * double-buffered streaming blocks + resident operands fit the budget.
    Fails loudly instead of silently overshooting VMEM."""
    cands = [t for t in range(1, bs + 1)
             if bs % t == 0
             and (((t * k) % 16 == 0 and t % 8 == 0) or t == bs)]
    for t in sorted(cands, reverse=True):
        if 2 * t * k * row_bytes + fixed_bytes <= budget_bytes:
            return t
    raise ValueError(
        "no row tile fits the VMEM budget; reduce nsample or channel widths "
        f"(bs={bs}, k={k}, row_bytes={row_bytes}, fixed_bytes={fixed_bytes})")


def run_mlp_max(x_flat, params, bs, k, *, tile_s=None, eps=1e-5):
    """x_flat: [bs*k, C_in] rows ordered (group, sample).
    params: list of (W[Cin,Cout], gamma[Cout], beta[Cout]) per layer.
    Returns [bs, C_last] f32 (max over the k samples of each group)."""
    m = bs * k
    assert x_flat.shape[0] == m

    # --- channel padding ------------------------------------------------------
    # Layer-1 input stays at (near) natural width: pad only to a 16-multiple
    # (bf16 sublane tile of the weight), stored bf16. No 128-lane f32 slab.
    c_in = x_flat.shape[1]
    c_in_pad = _round_up(max(c_in, 1), 16)
    x = jnp.pad(x_flat.astype(jnp.float32),
                ((0, 0), (0, c_in_pad - c_in))).astype(jnp.bfloat16)

    layers = []
    last_pad = c_in_pad
    for (w, g, be) in params:
        ci, co = w.shape
        co_pad = _pad_channels(co)
        w_pad = jnp.pad(w.astype(jnp.float32),
                        ((0, last_pad - ci), (0, co_pad - co)))
        g_pad = jnp.pad(g.astype(jnp.float32), (0, co_pad - co))  # 0 on pad chans
        b_pad = jnp.pad(be.astype(jnp.float32), (0, co_pad - co))
        layers.append((w_pad.astype(jnp.bfloat16), g_pad, b_pad, co_pad))
        last_pad = co_pad
    c_last = params[-1][0].shape[1]

    # --- VMEM budgeting / row tiling -------------------------------------------
    dims = [c_in_pad] + [co for *_, co in layers]
    # bytes streamed per row in the heaviest layer pass (bf16 in + bf16 out)
    row_bytes = max(dims[i] + dims[i + 1] for i in range(len(layers))) * 2
    # resident operands: double-buffered bf16 weights + scale/shift + stats + slack
    fixed_bytes = max(2 * dims[i] * dims[i + 1] * 2 for i in range(len(layers)))
    fixed_bytes += 4 * max(dims) * 4 + (2 << 20)
    phys_vmem = _physical_vmem_bytes()
    # ~96 MiB on v5e/v6e (128 MiB physical), ~48 MiB on v7x (64 MiB physical).
    vmem_limit = int(min(phys_vmem * 0.75, 112 * 1024 * 1024))
    if tile_s is None:
        tile_s = _choose_tile_s(bs, k, row_bytes, fixed_bytes, vmem_limit)
    assert bs % tile_s == 0
    assert ((tile_s * k) % 16 == 0 and tile_s % 8 == 0) or tile_s == bs
    tr = tile_s * k
    n_tiles = bs // tile_s

    # Per-core partial stats: a leading "parallel" split axis lets v7x's two
    # TensorCores each own half the row tiles AND their own stats slab (no
    # accumulator race); on 1-TC chips it is just an outer loop (harmless).
    num_splits = 2 if (n_tiles % 2 == 0 and n_tiles >= 2) else 1
    spس = None  # placeholder removed below
    spс = None  # placeholder removed below
    del spس, spс
    sps = n_tiles // num_splits          # sequential row tiles per split
    grid = (num_splits, sps)

    def row_map(c, i):
        return (c * sps + i, 0)

    def const_map(c, i):
        return (0, 0)

    def stats_map(c, i):
        return (c, 0, 0)

    # --- per-layer streaming passes ---------------------------------------------
    y = x
    c_prev = c_in_pad
    scale = None
    shift = None
    for li, (w_bf16, gamma, beta, c_out) in enumerate(layers):
        cost = pl.CostEstimate(
            flops=2 * m * c_prev * c_out,
            transcendentals=0,
            bytes_accessed=2 * (m * c_prev + m * c_out + c_prev * c_out) + 8 * c_out,
        )
        if li == 0:
            kern = _conv_stats_kernel
            in_specs = [
                pl.BlockSpec((tr, c_prev), row_map),
                pl.BlockSpec((c_prev, c_out), const_map),   # resident weights
            ]
            args = (y, w_bf16)
        else:
            kern = _bnrelu_conv_stats_kernel
            in_specs = [
                pl.BlockSpec((tr, c_prev), row_map),
                pl.BlockSpec((1, c_prev), const_map),
                pl.BlockSpec((1, c_prev), const_map),
                pl.BlockSpec((c_prev, c_out), const_map),
            ]
            args = (y, scale.reshape(1, -1), shift.reshape(1, -1), w_bf16)

        y, stats = pl.pallas_call(
            kern,
            out_shape=(jax.ShapeDtypeStruct((m, c_out), jnp.bfloat16),
                       jax.ShapeDtypeStruct((num_splits, 2, c_out), jnp.float32)),
            grid=grid,
            in_specs=in_specs,
            out_specs=(pl.BlockSpec((tr, c_out), row_map),
                       pl.BlockSpec((1, 2, c_out), stats_map)),
            compiler_params=pltpu.CompilerParams(
                # split axis parallel (v7x megacore); row tiles sequential so the
                # per-split stats slab can accumulate across them.
                dimension_semantics=("parallel", "arbitrary"),
                vmem_limit_bytes=vmem_limit),
            cost_estimate=cost,
        )(*args)

        # Fold training-mode BatchNorm into a per-channel scale/shift (tiny XLA op).
        # Conv bias is dropped: it is cancelled exactly by the BN mean subtraction.
        # TODO(synk): one-pass E[y^2]-E[y]^2 in f32 can cancel for |mean| >> std;
        # torch-exact numerics would need shifted / Welford partial sums.
        ssum = jnp.sum(stats, axis=0)            # combine per-split partial stats
        mean = ssum[0] / m
        var = jnp.maximum(ssum[1] / m - mean * mean, 0.0)  # biased var, as torch BN
        scale = gamma * jax.lax.rsqrt(var + eps)
        shift = beta - mean * scale
        c_prev = c_out

    # --- last layer's BN + ReLU fused with the max over the nsample axis --------
    out = pl.pallas_call(
        functools.partial(_bnrelu_max_kernel, tile_s=tile_s, k=k),
        out_shape=jax.ShapeDtypeStruct((bs, c_prev), jnp.float32),
        grid=(n_tiles,),
        in_specs=[pl.BlockSpec((tr, c_prev), lambda i: (i, 0)),
                  pl.BlockSpec((1, c_prev), lambda i: (0, 0)),
                  pl.BlockSpec((1, c_prev), lambda i: (0, 0))],
        out_specs=pl.BlockSpec((tile_s, c_prev), lambda i: (i, 0)),  # lane-dense store
        compiler_params=pltpu.CompilerParams(
            dimension_semantics=("parallel",),   # independent tiles -> both v7x TCs
            vmem_limit_bytes=vmem_limit),
    )(y, scale.reshape(1, -1), shift.reshape(1, -1))

    return out[:, :c_last]


# ----------------------------------------------------------------------------
# Module wrapper
# ----------------------------------------------------------------------------
class PointNetSetAbstraction:
    def __init__(self, npoint, radius, nsample, in_channel, mlp, group_all, key,
                 tile_s=None):
        self.npoint = npoint
        self.radius = radius
        self.nsample = nsample
        self.group_all = group_all
        self.tile_s = tile_s
        self.params = []
        last = in_channel
        for out_c in mlp:
            key, k1 = jax.random.split(key)
            w = jax.random.normal(k1, (last, out_c), jnp.float32) * 0.1  # conv weight
            # Conv2d bias omitted: under training-mode BatchNorm the mean
            # subtraction cancels it exactly, so the forward output is identical.
            gamma = jnp.ones((out_c,), jnp.float32)                      # BN weight
            beta = jnp.zeros((out_c,), jnp.float32)                      # BN bias
            self.params.append((w, gamma, beta))
            last = out_c

    def __call__(self, xyz, points):
        """
        xyz:    [B, 3, N]   points: [B, D, N] or None
        returns new_xyz [B, 3, S], new_points [B, C_last, S]
        """
        xyz_t = jnp.transpose(xyz, (0, 2, 1))                  # [B,N,3]
        pts_t = None if points is None else jnp.transpose(points, (0, 2, 1))
        if self.group_all:
            new_xyz, new_points = sample_and_group_all(xyz_t, pts_t)
        else:
            new_xyz, new_points = sample_and_group(
                self.npoint, self.radius, self.nsample, xyz_t, pts_t)
        # new_points: [B, S, K, C_in] -> rows ordered (b, s, n), channels last
        B, S, K, C_in = new_points.shape
        x_flat = new_points.reshape(B * S * K, C_in).astype(jnp.float32)
        out_flat = run_mlp_max(x_flat, self.params, B * S, K,
                               tile_s=self.tile_s)             # [B*S, C_last]
        c_last = out_flat.shape[-1]
        # Layout plumbing stays in XLA; the kernel output is lane-dense.
        new_points_out = jnp.transpose(out_flat.reshape(B, S, c_last), (0, 2, 1))
        new_xyz_out = jnp.transpose(new_xyz, (0, 2, 1))        # [B,3,S]
        return new_xyz_out, new_points_out


# ----------------------------------------------------------------------------
if __name__ == "__main__":
    key = jax.random.PRNGKey(0)
    kx, kp, kw = jax.random.split(key, 3)

    B, N, D = 2, 32, 4           # batch, points, extra feature channels
    npoint, radius, nsample = 16, 0.4, 8
    mlp = [16, 32]
    in_channel = D + 3

    xyz = jax.random.uniform(kx, (B, 3, N), jnp.float32)       # [B, 3, N]
    points = jax.random.normal(kp, (B, D, N), jnp.float32)     # [B, D, N]

    # tile_s=8 -> 4 row tiles of 64 rows: exercises the gridded pipeline, the
    # per-split partial-stats accumulator and the split-parallel grid axis.
    sa = PointNetSetAbstraction(npoint, radius, nsample, in_channel, mlp,
                                group_all=False, key=kw, tile_s=8)

    new_xyz, new_points = sa(xyz, points)
    new_xyz = jax.block_until_ready(new_xyz)
    new_points = jax.block_until_ready(new_points)

    assert new_xyz.shape == (B, 3, npoint)
    assert new_points.shape == (B, mlp[-1], npoint)
    assert bool(jnp.all(jnp.isfinite(new_points)))
    print("KERNEL_OK")
</pallas_src>

<mosaic_0001>
module attributes {stable_mosaic.version = 11 : i64} {
  func.func @_conv_stats_kernel(%arg0: i32, %arg1: i32, %arg2: memref<64x16xbf16, #tpu.memory_space<vmem>>, %arg3: memref<16x128xbf16, #tpu.memory_space<vmem>>, %arg4: memref<64x128xbf16, #tpu.memory_space<vmem>>, %arg5: memref<1x2x128xf32, #tpu.memory_space<vmem>>) attributes {dimension_semantics = [#tpu.dimension_semantics<parallel>, #tpu.dimension_semantics<arbitrary>], iteration_bounds = array<i64: 2, 2>, scalar_prefetch = 0 : i64, scratch_operands = 0 : i64, tpu.core_type = #tpu.core_type<tc>, window_params = [{transform_indices = @transform_0, window_bounds = array<i64: 64, 16>}, {pipeline_mode = #tpu.pipeline_mode<synchronous>, transform_indices = @transform_1, window_bounds = array<i64: 16, 128>}, {transform_indices = @transform_2, window_bounds = array<i64: 64, 128>}, {transform_indices = @transform_3, window_bounds = array<i64: 1, 2, 128>}]} {
    %c0_i32 = arith.constant 0 : i32
    %0 = arith.cmpi eq, %arg1, %c0_i32 : i32
    %1 = arith.extui %0 : i1 to i32
    %c0_i32_0 = arith.constant 0 : i32
    %2 = arith.cmpi ne, %1, %c0_i32_0 : i32
    scf.if %2 {
      %cst_14 = arith.constant 0.000000e+00 : f32
      %18 = vector.broadcast %cst_14 : f32 to vector<1x2x128xf32>
      %c0_15 = arith.constant 0 : index
      %c0_16 = arith.constant 0 : index
      %c0_17 = arith.constant 0 : index
      %19 = vector.load %arg5[%c0_15, %c0_16, %c0_17] : memref<1x2x128xf32, #tpu.memory_space<vmem>>, vector<1x2x128xf32>
      tpu.vector_store %arg5[%c0_15, %c0_16, %c0_17], %18 {strides = array<i32>} : memref<1x2x128xf32, #tpu.memory_space<vmem>>, vector<1x2x128xf32>,
    } else {
    }
    %c0 = arith.constant 0 : index
    %c0_1 = arith.constant 0 : index
    %3 = vector.load %arg2[%c0, %c0_1] : memref<64x16xbf16, #tpu.memory_space<vmem>>, vector<64x16xbf16>
    %c0_2 = arith.constant 0 : index
    %c0_3 = arith.constant 0 : index
    %4 = vector.load %arg3[%c0_2, %c0_3] : memref<16x128xbf16, #tpu.memory_space<vmem>>, vector<16x128xbf16>
    %cst = arith.constant dense<0.000000e+00> : vector<64x128xf32>
    %5 = tpu.matmul %3, %4, %cst {dimension_numbers = #tpu.dot_dimension_numbers<[1], [0], [0], [1], [0, 0, 1, 1], [], []>} : vector<64x16xbf16>, vector<16x128xbf16>, vector<64x128xf32> -> vector<64x128xf32>
    %6 = arith.truncf %5 : vector<64x128xf32> to vector<64x128xbf16>
    %c0_4 = arith.constant 0 : index
    %c0_5 = arith.constant 0 : index
    %7 = vector.load %arg4[%c0_4, %c0_5] : memref<64x128xbf16, #tpu.memory_space<vmem>>, vector<64x128xbf16>
    tpu.vector_store %arg4[%c0_4, %c0_5], %6 {strides = array<i32>} : memref<64x128xbf16, #tpu.memory_space<vmem>>, vector<64x128xbf16>,
    %cst_6 = arith.constant dense<0.000000e+00> : vector<128xf32>
    %8 = vector.multi_reduction <add>, %5, %cst_6 [0] : vector<64x128xf32> to vector<128xf32>
    %9 = vector.shape_cast %8 : vector<128xf32> to vector<1x128xf32>
    %10 = arith.mulf %5, %5 : vector<64x128xf32>
    %cst_7 = arith.constant dense<0.000000e+00> : vector<128xf32>
    %11 = vector.multi_reduction <add>, %10, %cst_7 [0] : vector<64x128xf32> to vector<128xf32>
    %12 = vector.shape_cast %11 : vector<128xf32> to vector<1x128xf32>
    %13 = tpu.concatenate %9, %12 in 0 : vector<1x128xf32>, vector<1x128xf32> -> vector<2x128xf32>
    %c0_8 = arith.constant 0 : index
    %c0_9 = arith.constant 0 : index
    %c0_10 = arith.constant 0 : index
    %14 = vector.load %arg5[%c0_8, %c0_9, %c0_10] : memref<1x2x128xf32, #tpu.memory_space<vmem>>, vector<1x2x128xf32>
    %15 = vector.shape_cast %13 : vector<2x128xf32> to vector<1x2x128xf32>
    %16 = arith.addf %14, %15 : vector<1x2x128xf32>
    %c0_11 = arith.constant 0 : index
    %c0_12 = arith.constant 0 : index
    %c0_13 = arith.constant 0 : index
    %17 = vector.load %arg5[%c0_11, %c0_12, %c0_13] : memref<1x2x128xf32, #tpu.memory_space<vmem>>, vector<1x2x128xf32>
    tpu.vector_store %arg5[%c0_11, %c0_12, %c0_13], %16 {strides = array<i32>} : memref<1x2x128xf32, #tpu.memory_space<vmem>>, vector<1x2x128xf32>,
    return
  }
  func.func @transform_0(%arg0: i32, %arg1: i32) -> (i32, i32) {
    %c2_i32 = arith.constant 2 : i32
    %0 = arith.muli %arg0, %c2_i32 : i32
    %1 = arith.addi %0, %arg1 : i32
    %c0_i32 = arith.constant 0 : i32
    %c0_i32_0 = arith.constant 0 : i32
    return %1, %c0_i32 : i32, i32
  }
  func.func @transform_1(%arg0: i32, %arg1: i32) -> (i32, i32) {
    %c0_i32 = arith.constant 0 : i32
    %c0_i32_0 = arith.constant 0 : i32
    %c0_i32_1 = arith.constant 0 : i32
    return %c0_i32, %c0_i32_0 : i32, i32
  }
  func.func @transform_2(%arg0: i32, %arg1: i32) -> (i32, i32) {
    %c2_i32 = arith.constant 2 : i32
    %0 = arith.muli %arg0, %c2_i32 : i32
    %1 = arith.addi %0, %arg1 : i32
    %c0_i32 = arith.constant 0 : i32
    %c0_i32_0 = arith.constant 0 : i32
    return %1, %c0_i32 : i32, i32
  }
  func.func @transform_3(%arg0: i32, %arg1: i32) -> (i32, i32, i32) {
    %c0_i32 = arith.constant 0 : i32
    %c0_i32_0 = arith.constant 0 : i32
    %c0_i32_1 = arith.constant 0 : i32
    return %arg0, %c0_i32, %c0_i32_0 : i32, i32, i32
  }
}

</mosaic_0001>

<llo_original>
// kernel: tpu_custom_call.1
$region0: #{tpu_custom_call.1}
  #allocation0 [shape = 'u32[]', space=smem, size = 0x4, offset = 0x4, fixed_abs, tag = 'smem constant byte address 0x4 - core index']
  #allocation1 [shape = 'u32[144,128]{1,0:T(1,128)}', space=vmem, size = 0x12000, scoped, tag = 'internal scratch']
  %s0 = inlined_call_operand.vmem [shape: bf16[256,16], index: 0, kind: input, shape index: {}]
  %s1 = inlined_call_operand.vmem [shape: bf16[16,128], index: 1, kind: input, shape index: {}]
  %s2 = inlined_call_operand.hbm [shape: bf16[256,128], index: 2, kind: output, shape index: {0}]
  %s3 = inlined_call_operand.hbm [shape: f32[2,2,128], index: 3, kind: output, shape index: {1}]
  %4 = xla_tuple %s2, %s3
  %s5 = sld [smem:[#allocation0]]
  $region53: #{tpu_custom_call.1} parent=0
    _
  %s7 = ssub.s32 1, %s5
  %s8 = scalar_select 0, %s7, %s5
  $region1: #{tpu_custom_call.1} parent=0
    #allocation2 [shape = 'u8[32768]{0}', space=vmem, size = 0x8000, scoped, tag = 'output window, operand 0']
    #allocation3 [shape = 's32[2]{0}', space=sflag, size = 0x8, scoped, tag = 'scoped memory for tpu_custom_call.1']
    #allocation4 [shape = 'u8[2048]{0}', space=vmem, size = 0x800, scoped, tag = 'output window, operand 1']
    #allocation5 [shape = 's32[2]{0}', space=sflag, size = 0x8, scoped, tag = 'scoped memory for tpu_custom_call.1']
    %9 = vsyncpa [#allocation3], 0
    %s10 = scalar_lea.sflag [#allocation3], 1
    %11 = vsyncpa %s10, 0
    %12 = vsyncpa [#allocation5], 0
    %s13 = scalar_lea.sflag [#allocation5], 1
    %14 = vsyncpa %s13, 0
    loop: start=0, step=1, limit=6
    $region2: #{tpu_custom_call.1} parent=1 // loop_pre_header
      _
    $region3: #{tpu_custom_call.1} parent=1 // loop_header
      %s16 = sphi 0, %s20
      %p17 = scmp.ge.s32.totalorder %s16, 6
      %s23 = sphi 0, %s35
      %s24 = sphi 0, %s31
      %s25 = sphi 0, %s23
      %s26 = sphi 0, %s24
      %s27 = sphi 0, %s25
      %s28 = sphi 0, %s26
      %s42 = sphi 0, %s44
      %s45 = sphi 0, %s42
      %s46 = sphi 0, %s45
      %s62 = sphi 0, %s46
      %s66 = sphi 0, %s66
      %s68 = sphi 0, %s66
      %s69 = sphi 0, %s68
      %s83 = sphi 0, %s69
      %s93 = sphi 0, %s95
      %s96 = sphi 0, %s93
      %s97 = sphi 0, %s96
      %s113 = sphi 0, %s97
      %s119 = sphi 0, %s121
      %s122 = sphi 0, %s119
      %s123 = sphi 0, %s122
      %s139 = sphi 0, %s123
    $region4: #{tpu_custom_call.1} parent=1 // loop_header_branch
      %19 = sbr.rel (%p17) target = $region8
    $region5: #{tpu_custom_call.1} parent=1 // loop_body
      %s21 = ssub.s32 %s16, 1
      %s22 = ssub.s32 %s16, 2
      %s29 = sadd.s32 1, %s24
      %p30 = scmp.ge.s32.totalorder %s29, 2
      %s31 = scalar_select %p30, 0, %s29
      %s32 = sadd.s32 1, %s23
      %s33 = scalar_select %p30, %s32, %s23
      %p34 = scmp.ge.s32.totalorder %s33, 2
      %s35 = scalar_select %p34, 0, %s33
      %s36 = smul.u32 %s23, 2
      %s37 = sadd.s32 %s36, %s24
      %s38 = smul.u32 %s35, 2
      %s39 = sadd.s32 %s38, %s31
      %s40 = ssub.s32 %s37, %s39
      %p41 = scmp.eq.s32.totalorder %s40, 0
      %s43 = sadd.s32 %s42, 1
      %s44 = scalar_select %p41, %s42, %s43
      %p47 = pneg %p41
      %p48 = scmp.eq.s32.totalorder %s16, 3
      %p49 = por %p47, %p48
      %p50 = scmp.ne.s32.totalorder %s42, %s45
      %p51 = scmp.eq.s32.totalorder %s16, 0
      %p52 = por %p50, %p51
      %p53 = scmp.ne.s32.totalorder %s42, %s45
      %p54 = scmp.eq.s32.totalorder %s21, 3
      %p55 = por %p53, %p54
      %p56 = scmp.ne.s32.totalorder %s45, %s46
      %p57 = scmp.eq.s32.totalorder %s21, 0
      %p58 = por %p56, %p57
      %p59 = scmp.ne.s32.totalorder %s45, %s46
      %p60 = scmp.eq.s32.totalorder %s22, 3
      %p61 = por %p59, %p60
      %p63 = scmp.ne.s32.totalorder %s46, %s62
      %p64 = scmp.eq.s32.totalorder %s22, 0
      %p65 = por %p63, %p64
      %s67 = sadd.s32 %s66, 1
      %p70 = scmp.eq.s32.totalorder %s16, 3
      %p71 = scmp.ne.s32.totalorder %s66, %s68
      %p72 = scmp.eq.s32.totalorder %s16, 0
      %p73 = por %p71, %p72
      %p74 = scmp.ne.s32.totalorder %s66, %s68
      %p75 = scmp.eq.s32.totalorder %s21, 3
      %p76 = por %p74, %p75
      %p77 = scmp.ne.s32.totalorder %s68, %s69
      %p78 = scmp.eq.s32.totalorder %s21, 0
      %p79 = por %p77, %p78
      %p80 = scmp.ne.s32.totalorder %s68, %s69
      %p81 = scmp.eq.s32.totalorder %s22, 3
      %p82 = por %p80, %p81
      %p84 = scmp.ne.s32.totalorder %s69, %s83
      %p85 = scmp.eq.s32.totalorder %s22, 0
      %p86 = por %p84, %p85
      %s87 = smul.u32 %s23, 2
      %s88 = sadd.s32 %s87, %s24
      %s89 = smul.u32 %s35, 2
      %s90 = sadd.s32 %s89, %s31
      %s91 = ssub.s32 %s88, %s90
      %p92 = scmp.eq.s32.totalorder %s91, 0
      %s94 = sadd.s32 %s93, 1
      %s95 = scalar_select %p92, %s93, %s94
      %p98 = pneg %p92
      %p99 = scmp.eq.s32.totalorder %s16, 3
      %p100 = por %p98, %p99
      %p101 = scmp.ne.s32.totalorder %s93, %s96
      %p102 = scmp.eq.s32.totalorder %s16, 0
      %p103 = por %p101, %p102
      %p104 = scmp.ne.s32.totalorder %s93, %s96
      %p105 = scmp.eq.s32.totalorder %s21, 3
      %p106 = por %p104, %p105
      %p107 = scmp.ne.s32.totalorder %s96, %s97
      %p108 = scmp.eq.s32.totalorder %s21, 0
      %p109 = por %p107, %p108
      %p110 = scmp.ne.s32.totalorder %s96, %s97
      %p111 = scmp.eq.s32.totalorder %s22, 3
      %p112 = por %p110, %p111
      %p114 = scmp.ne.s32.totalorder %s97, %s113
      %p115 = scmp.eq.s32.totalorder %s22, 0
      %p116 = por %p114, %p115
      %s117 = ssub.s32 %s23, %s35
      %p118 = scmp.eq.s32.totalorder %s117, 0
      %s120 = sadd.s32 %s119, 1
      %s121 = scalar_select %p118, %s119, %s120
      %p124 = pneg %p118
      %p125 = scmp.eq.s32.totalorder %s16, 3
      %p126 = por %p124, %p125
      %p127 = scmp.ne.s32.totalorder %s119, %s122
      %p128 = scmp.eq.s32.totalorder %s16, 0
      %p129 = por %p127, %p128
      %p130 = scmp.ne.s32.totalorder %s119, %s122
      %p131 = scmp.eq.s32.totalorder %s21, 3
      %p132 = por %p130, %p131
      %p133 = scmp.ne.s32.totalorder %s122, %s123
      %p134 = scmp.eq.s32.totalorder %s21, 0
      %p135 = por %p133, %p134
      %p136 = scmp.ne.s32.totalorder %s122, %s123
      %p137 = scmp.eq.s32.totalorder %s22, 3
      %p138 = por %p136, %p137
      %p140 = scmp.ne.s32.totalorder %s123, %s139
      %p141 = scmp.eq.s32.totalorder %s22, 0
      %p142 = por %p140, %p141
      %p143 = scmp.le.s32.totalorder 1, %s16
      %p144 = scmp.lt.s32.totalorder %s16, 5
      %p145 = pnand %p143, %p144
      %p146 = pneg %p145
      // Predicated region
      $region9: #{tpu_custom_call.1} parent=5 // pred_check
        _
      $region10: #{tpu_custom_call.1} parent=5 // pred_check_branch
        %148 = sbr.rel (%p145) target = $region12
      $region11: #{tpu_custom_call.1} parent=5 // pred_region
        %s149 = ssub.s32 %s16, 1
        // Predicated region
        $region13: #{tpu_custom_call.1} parent=11 // pred_check
          %p150 = pneg %p79
        $region14: #{tpu_custom_call.1} parent=11 // pred_check_branch
          %152 = sbr.rel (%p150) target = $region16
        $region15: #{tpu_custom_call.1} parent=11 // pred_region
          _
        $region16: #{tpu_custom_call.1} parent=11 // pred_fallthru
          _
      $region12: #{tpu_custom_call.1} parent=5 // pred_fallthru
        _
      %p153 = scmp.lt.s32.totalorder %s16, 4
      // Predicated region
      $region17: #{tpu_custom_call.1} parent=5 // pred_check
        %p154 = pneg %p153
      $region18: #{tpu_custom_call.1} parent=5 // pred_check_branch
        %156 = sbr.rel (%p154) target = $region20
      $region19: #{tpu_custom_call.1} parent=5 // pred_region
        // Predicated region
        $region21: #{tpu_custom_call.1} parent=19 // pred_check
          %p157 = pneg %p52
        $region22: #{tpu_custom_call.1} parent=19 // pred_check_branch
          %159 = sbr.rel (%p157) target = $region24
        $region23: #{tpu_custom_call.1} parent=19 // pred_region
          %s160 = smul.u32 %s23, 2
          %s161 = sadd.s32 %s160, %s24
          %s162 = smul.u32 8, %s161
          %p163 = scmp.lt.s32.totalorder %s162, 31
          %s164 = scalar_select %p163, %s162, 31
          %s165 = smul.addr %s164, 4
          %s166 = scalar_lea.vmem %s0, %s165
          %s167 = smul.u32 %s23, 2
          %s168 = sadd.s32 %s167, %s24
          %s169 = smul.u32 8, %s168
        $region24: #{tpu_custom_call.1} parent=19 // pred_fallthru
          _
      $region20: #{tpu_custom_call.1} parent=5 // pred_fallthru
        _
      %p170 = scmp.le.s32.totalorder 1, %s16
      %p171 = scmp.lt.s32.totalorder %s16, 5
      %p172 = pnand %p170, %p171
      %p173 = pneg %p172
      // Predicated region
      $region25: #{tpu_custom_call.1} parent=5 // pred_check
        _
      $region26: #{tpu_custom_call.1} parent=5 // pred_check_branch
        %175 = sbr.rel (%p172) target = $region28
      $region27: #{tpu_custom_call.1} parent=5 // pred_region
        %s176 = ssub.s32 %s16, 1
        %s177 = smul.u32 %s25, 2
        %s178 = sadd.s32 %s177, %s26
        %s179 = smul.u32 8, %s178
        %p180 = scmp.lt.s32.totalorder %s179, 31
        %s181 = scalar_select %p180, %s179, 31
        %s182 = smul.addr %s181, 4
        %s183 = scalar_lea.vmem %s0, %s182
        %p184 = pneg %p58
        %p185 = pneg %p55
        %p186 = pneg %p79
        %p187 = pneg %p76
        %p188 = pneg %p109
        %p189 = pneg %p106
        %s190 = sand.u32 %s96, 1
        %s191 = scalar_lea.sflag [#allocation3], %s190
        %s192 = sand.u32 %s96, 1
        %s193 = smul.addr %s192, 32
        %s194 = scalar_lea.vmem [#allocation2], %s193
        %p195 = pneg %p135
        %p196 = pneg %p132
        %s197 = sand.u32 %s122, 1
        %s198 = scalar_lea.sflag [#allocation5], %s197
        %s199 = sand.u32 %s122, 1
        %s200 = smul.addr %s199, 2
        %s201 = scalar_lea.vmem [#allocation4], %s200
        %s202 = smul.u32 %s25, 2
        %s203 = sadd.s32 %s202, %s26
        %s204 = smul.u32 8, %s203
        %p205 = scmp.lt.s32.totalorder %s204, 31
        %s206 = scalar_select %p205, %s204, 31
        %s207 = smul.addr %s206, 4
        %s208 = scalar_lea.vmem %s0, %s207
        %s209 = smul.u32 %s25, 2
        %s210 = sadd.s32 %s209, %s26
        %s211 = smul.u32 8, %s210
        %s212 = smul.u32 %s25, 2
        %s213 = sadd.s32 %s212, %s26
        %s214 = smul.u32 8, %s213
        %p216 = scmp.eq.s32.totalorder %s26, 0
        // Predicated region
        $region29: #{tpu_custom_call.1} parent=27 // pred_check
          %p217 = pneg %p216
        $region30: #{tpu_custom_call.1} parent=27 // pred_check_branch
          %219 = sbr.rel (%p217) target = $region32
        $region31: #{tpu_custom_call.1} parent=27 // pred_region
          %220 = vst [vmem:[%s201] sm:$0x3] 0.0
        $region32: #{tpu_custom_call.1} parent=27 // pred_fallthru
          _
        %v221 = vld [vmem:[%s208] sm:$0xf]
        %v222 = vld [vmem:[%s208 + $0x4] sm:$0xf]
        %v223 = vld [vmem:[%s208 + $0x8] sm:$0xf]
        %v224 = vld [vmem:[%s208 + $0xc] sm:$0xf]
        %v225 = vld [vmem:[%s208 + $0x10] sm:$0xf]
        %v226 = vld [vmem:[%s208 + $0x14] sm:$0xf]
        %v227 = vld [vmem:[%s208 + $0x18] sm:$0xf]
        %v228 = vld [vmem:[%s208 + $0x1c] sm:$0xf]
        %v229 = vld [vmem:[%s1] sm:$0xf]
        %v230 = vld [vmem:[%s1 + $0x4] sm:$0xf]
        %v239 = vunpack.c.l.b16 %v221
        %v240 = vunpack.c.l.b16 %v222
        %v241 = vunpack.c.l.b16 %v223
        %v242 = vunpack.c.l.b16 %v224
        %v243 = vunpack.c.l.b16 %v225
        %v244 = vunpack.c.l.b16 %v226
        %v245 = vunpack.c.l.b16 %v227
        %v246 = vunpack.c.l.b16 %v228
        %v247 = vpack.c.b16 %v240, %v239
        %v248 = vpack.c.b16 %v242, %v241
        %v249 = vpack.c.b16 %v244, %v243
        %v250 = vpack.c.b16 %v246, %v245
        %v253 = vunpack.c.l.b16 %v229
        %v254 = vunpack.c.l.b16 %v230
        %v255 = vpack.c.b16 %v254, %v253
        %vm257 = vcmask 130048
        %v259 = vsel %vm257, %v247, 0
        %v262 = vsel %vm257, %v248, 0
        %v265 = vsel %vm257, %v249, 0
        %v268 = vsel %vm257, %v250, 0
        %270 = vmatprep.subr.bf16.mxu0 0
        %271 = vmatpush1.bf16.msra.mxu0 %v255
        %272 = vmatprep.subr.bf16.mxu0 0
        %273 = vmatpush1.bf16.msra.mxu0 0
        %274 = vmatprep.subr.bf16.mxu0 0
        %275 = vmatpush1.bf16.msra.mxu0 0
        %276 = vmatprep.subr.bf16.mxu0 0
        %277 = vmatpush1.bf16.msra.mxu0 0
        %278 = vmatprep.subr.bf16.mxu0 0
        %279 = vmatpush1.bf16.msra.mxu0 0
        %280 = vmatprep.subr.bf16.mxu0 0
        %281 = vmatpush1.bf16.msra.mxu0 0
        %282 = vmatprep.subr.bf16.mxu0 0
        %283 = vmatpush1.bf16.msra.mxu0 0
        %284 = vmatprep.subr.bf16.mxu0 0
        %285 = vmatpush1.bf16.msra.mxu0 0
        %286 = vmatprep.subr.bf16.mxu0 0
        %287 = vmatpush1.bf16.msra.mxu0 0
        %288 = vmatprep.subr.bf16.mxu0 0
        %289 = vmatpush1.bf16.msra.mxu0 0
        %290 = vmatprep.subr.bf16.mxu0 0
        %291 = vmatpush1.bf16.msra.mxu0 0
        %292 = vmatprep.subr.bf16.mxu0 0
        %293 = vmatpush1.bf16.msra.mxu0 0
        %294 = vmatprep.subr.bf16.mxu0 0
        %295 = vmatpush1.bf16.msra.mxu0 0
        %296 = vmatprep.subr.bf16.mxu0 0
        %297 = vmatpush1.bf16.msra.mxu0 0
        %298 = vmatprep.subr.bf16.mxu0 0
        %299 = vmatpush1.bf16.msra.mxu0 0
        %300 = vmatprep.subr.bf16.mxu0 0
        %301 = vmatpush1.bf16.msra.mxu0 0
        %302 = vmatprep.mubr.bf16.mxu0 0
        %303 = vmatmul.mubr.bf16.gmra.mrb[0].mxu0 %v259
        %v304 = vpop.f32.mrb[0].mxu0
        %v305 = vadd.f32 0.0, %v304
        %v306 = vpop.f32.mrb[0].mxu0
        %v307 = vpop.f32.mrb[0].mxu0
        %v308 = vadd.f32 0.0, %v307
        %v309 = vpop.f32.mrb[0].mxu0
        %310 = vmatprep.mubr.bf16.mxu0 0
        %311 = vmatmul.mubr.bf16.gmra.mrb[0].mxu0 %v262
        %v312 = vpop.f32.mrb[0].mxu0
        %v313 = vadd.f32 0.0, %v312
        %v314 = vpop.f32.mrb[0].mxu0
        %v315 = vpop.f32.mrb[0].mxu0
        %v316 = vadd.f32 0.0, %v315
        %v317 = vpop.f32.mrb[0].mxu0
        %318 = vmatprep.mubr.bf16.mxu0 0
        %319 = vmatmul.mubr.bf16.gmra.mrb[0].mxu0 %v265
        %v320 = vpop.f32.mrb[0].mxu0
        %v321 = vadd.f32 0.0, %v320
        %v322 = vpop.f32.mrb[0].mxu0
        %v323 = vpop.f32.mrb[0].mxu0
        %v324 = vadd.f32 0.0, %v323
        %v325 = vpop.f32.mrb[0].mxu0
        %326 = vmatprep.mubr.bf16.mxu0 0
        %327 = vmatmul.mubr.bf16.gmra.mrb[0].mxu0 %v268
        %v328 = vpop.f32.mrb[0].mxu0
        %v329 = vadd.f32 0.0, %v328
        %v330 = vpop.f32.mrb[0].mxu0
        %v331 = vpop.f32.mrb[0].mxu0
        %v332 = vadd.f32 0.0, %v331
        %v333 = vpop.f32.mrb[0].mxu0
        %334 = vdwg.mxu0
        %v335 = vpack.c.bf16 %v308, %v305
        %v336 = vpack.c.bf16 %v316, %v313
        %v337 = vpack.c.bf16 %v324, %v321
        %v338 = vpack.c.bf16 %v332, %v329
        %v343 = vunpack.c.l.b16 %v335
        %v344 = vunpack.c.h.b16 %v335
        %v345 = vunpack.c.l.b16 %v336
        %v346 = vunpack.c.h.b16 %v336
        %v347 = vunpack.c.l.b16 %v337
        %v348 = vunpack.c.h.b16 %v337
        %v349 = vunpack.c.l.b16 %v338
        %v350 = vunpack.c.h.b16 %v338
        %v351 = vpack.c.b16 %v343, %v343
        %v352 = vpack.c.b16 %v344, %v344
        %v353 = vpack.c.b16 %v345, %v345
        %v354 = vpack.c.b16 %v346, %v346
        %v355 = vpack.c.b16 %v347, %v347
        %v356 = vpack.c.b16 %v348, %v348
        %v357 = vpack.c.b16 %v349, %v349
        %v358 = vpack.c.b16 %v350, %v350
        %367 = vst [vmem:[%s194] sm:$0xf] %v351
        %368 = vst [vmem:[%s194 + $0x4] sm:$0xf] %v352
        %369 = vst [vmem:[%s194 + $0x8] sm:$0xf] %v353
        %370 = vst [vmem:[%s194 + $0xc] sm:$0xf] %v354
        %371 = vst [vmem:[%s194 + $0x10] sm:$0xf] %v355
        %372 = vst [vmem:[%s194 + $0x14] sm:$0xf] %v356
        %373 = vst [vmem:[%s194 + $0x18] sm:$0xf] %v357
        %374 = vst [vmem:[%s194 + $0x1c] sm:$0xf] %v358
        %v375 = vadd.f32 %v305, %v308
        %v376 = vadd.f32 %v375, %v313
        %v377 = vadd.f32 %v376, %v316
        %v378 = vadd.f32 %v377, %v321
        %v379 = vadd.f32 %v378, %v324
        %v380 = vadd.f32 %v379, %v329
        %v381 = vadd.f32 %v380, %v332
        %v382 = vrot.slane %v381, 4
        %v383 = vadd.f32 %v381, %v382
        %v384 = vrot.slane %v383, 2
        %v385 = vadd.f32 %v383, %v384
        %v386 = vrot.slane %v385, 1
        %v387 = vadd.f32 %v385, %v386
        %v388 = vmul.f32 %v305, %v305
        %v389 = vmul.f32 %v308, %v308
        %v390 = vmul.f32 %v313, %v313
        %v391 = vmul.f32 %v316, %v316
        %v392 = vmul.f32 %v321, %v321
        %v393 = vmul.f32 %v324, %v324
        %v394 = vmul.f32 %v329, %v329
        %v395 = vmul.f32 %v332, %v332
        %v396 = vadd.f32 %v388, %v389
        %v397 = vadd.f32 %v396, %v390
        %v398 = vadd.f32 %v397, %v391
        %v399 = vadd.f32 %v398, %v392
        %v400 = vadd.f32 %v399, %v393
        %v401 = vadd.f32 %v400, %v394
        %v402 = vadd.f32 %v401, %v395
        %v403 = vrot.slane %v402, 4
        %v404 = vadd.f32 %v402, %v403
        %v405 = vrot.slane %v404, 2
        %v406 = vadd.f32 %v404, %v405
        %v407 = vrot.slane %v406, 1
        %v408 = vadd.f32 %v406, %v407
        %vm409 = vcmask 1040384
        %v410 = vsel %vm409, %v387, %v408
        %v411 = vld [vmem:[%s201] sm:$0x3]
        %v412 = vadd.f32 %v411, %v410
        %413 = vst [vmem:[%s201] sm:$0x3] %v412
        %s414 = sand.u32 %s96, 1
        %s415 = scalar_lea.sflag [#allocation3], %s414
        %s416 = sand.u32 %s96, 1
        %s417 = smul.addr %s416, 32
        %s418 = scalar_lea.vmem [#allocation2], %s417
        %s419 = sand.u32 %s122, 1
        %s420 = scalar_lea.sflag [#allocation5], %s419
        %s421 = sand.u32 %s122, 1
        %s422 = smul.addr %s421, 2
        %s423 = scalar_lea.vmem [#allocation4], %s422
        // Predicated region
        $region33: #{tpu_custom_call.1} parent=27 // pred_check
          %p424 = pneg %p106
        $region34: #{tpu_custom_call.1} parent=27 // pred_check_branch
          %426 = sbr.rel (%p424) target = $region36
        $region35: #{tpu_custom_call.1} parent=27 // pred_region
          %s427 = smul.u32 %s25, 2
          %s428 = sadd.s32 %s427, %s26
          %s429 = smul.u32 8, %s428
          %s431 = ssub.s32 512, 512
          %432 = vsyncadd %s415, %s431
          %s433 = smul.addr %s429, 64
          %s434 = scalar_lea.hbm %s2, %s433
          %s435 = sshll.u32 %s418, 4
          %s436 = int_to_ptr.vmem [resolvable:$true] %s435
          %441 = dma.vmem_to_hbm [thread:$0]  %s436, 512, %s434, %s415, 64, 64, 4
        $region36: #{tpu_custom_call.1} parent=27 // pred_fallthru
          _
        // Predicated region
        $region37: #{tpu_custom_call.1} parent=27 // pred_check
          %p442 = pneg %p132
        $region38: #{tpu_custom_call.1} parent=27 // pred_check_branch
          %444 = sbr.rel (%p442) target = $region40
        $region39: #{tpu_custom_call.1} parent=27 // pred_region
          %s446 = ssub.s32 32, 32
          %447 = vsyncadd %s420, %s446
          %s448 = smul.addr %s25, 32
          %s449 = scalar_lea.hbm %s3, %s448
          %s451 = sshll.u32 %s423, 4
          %s452 = int_to_ptr.vmem [resolvable:$true] %s451
          %454 = dma.vmem_to_hbm [thread:$0]  %s452, 32, %s449, %s420
        $region40: #{tpu_custom_call.1} parent=27 // pred_fallthru
          _
      $region28: #{tpu_custom_call.1} parent=5 // pred_fallthru
        _
      %p455 = scmp.le.s32.totalorder 2, %s16
      // Predicated region
      $region41: #{tpu_custom_call.1} parent=5 // pred_check
        %p456 = pneg %p455
      $region42: #{tpu_custom_call.1} parent=5 // pred_check_branch
        %458 = sbr.rel (%p456) target = $region44
      $region43: #{tpu_custom_call.1} parent=5 // pred_region
        %s459 = ssub.s32 %s16, 2
        // Predicated region
        $region45: #{tpu_custom_call.1} parent=43 // pred_check
          %p460 = pneg %p112
        $region46: #{tpu_custom_call.1} parent=43 // pred_check_branch
          %462 = sbr.rel (%p460) target = $region48
        $region47: #{tpu_custom_call.1} parent=43 // pred_region
          %s463 = sand.u32 %s97, 1
          %s464 = scalar_lea.sflag [#allocation3], %s463
          %s465 = sand.u32 %s97, 1
          %s466 = smul.addr %s465, 32
          %s467 = scalar_lea.vmem [#allocation2], %s466
          %468 = dma.done %s464, 512
        $region48: #{tpu_custom_call.1} parent=43 // pred_fallthru
          _
        // Predicated region
        $region49: #{tpu_custom_call.1} parent=43 // pred_check
          %p469 = pneg %p138
        $region50: #{tpu_custom_call.1} parent=43 // pred_check_branch
          %471 = sbr.rel (%p469) target = $region52
        $region51: #{tpu_custom_call.1} parent=43 // pred_region
          %s472 = sand.u32 %s123, 1
          %s473 = scalar_lea.sflag [#allocation5], %s472
          %s474 = sand.u32 %s123, 1
          %s475 = smul.addr %s474, 2
          %s476 = scalar_lea.vmem [#allocation4], %s475
          %477 = dma.done %s473, 32
        $region52: #{tpu_custom_call.1} parent=43 // pred_fallthru
          _
      $region44: #{tpu_custom_call.1} parent=5 // pred_fallthru
        _
    $region6: #{tpu_custom_call.1} parent=1 // loop_footer
      %s20 = sadd.s32 1, %s16
    $region7: #{tpu_custom_call.1} parent=1 // loop_footer_branch
      %15 = sbr.rel target = $region3
    $region8: #{tpu_custom_call.1} parent=1 // loop_exit
      _
    %478 = vsyncpa [#allocation3], 1
    %s479 = scalar_lea.sflag [#allocation3], 1
    %480 = vsyncpa %s479, 1
    %481 = vsyncpa [#allocation5], 1
    %s482 = scalar_lea.sflag [#allocation5], 1
    %483 = vsyncpa %s482, 1

</llo_original>
